<compile_context>
chip_gen: v7x
topology: tpu7x:2x2x1
jax: 0.10.0
libtpu: 0.0.40
codegen_flags: <defaults>
</compile_context>

<pallas_src>
import jax
import jax.numpy as jnp
from jax.experimental import pallas as pl
from jax.experimental.pallas import tpu as pltpu

OUT_FEATURES = 2
OUT_PAD = 8  # narrow, sublane-friendly padded logits width


def mlp_kernel(x_ref, w1_ref, b1_ref, w2_ref, b2_ref, w3_ref, b3_ref,
               w4_ref, b4_ref, o_ref):
    # x arrives as f32 straight from HBM; cast to bf16 in-kernel (cheap VPU work).
    x = x_ref[...].astype(jnp.bfloat16)                       # (tb, 128)

    h = jnp.dot(x, w1_ref[...], preferred_element_type=jnp.float32) + b1_ref[...]
    h = jnp.maximum(h, 0.0).astype(jnp.bfloat16)
    # TODO(synk): Dropout(p=0.3) omitted (inference semantics: identity; no training-mode mask).

    h = jnp.dot(h, w2_ref[...], preferred_element_type=jnp.float32) + b2_ref[...]
    h = jnp.maximum(h, 0.0).astype(jnp.bfloat16)

    h = jnp.dot(h, w3_ref[...], preferred_element_type=jnp.float32) + b3_ref[...]
    h = jnp.maximum(h, 0.0).astype(jnp.bfloat16)

    # Final layer padded only to 8 output lanes -> narrow (tb, 8) f32 store.
    o = jnp.dot(h, w4_ref[...], preferred_element_type=jnp.float32) + b4_ref[...]
    o_ref[...] = o.astype(o_ref.dtype)


def _pick_tile(B, tb_max=2048):
    """Sublane-aligned batch tile: big (single-TC v5e/v6e roofline), but >=2 grid
    steps when possible so the parallel axis shards across v7x's two TensorCores."""
    if B <= 8:
        return 8
    tb = min(tb_max, pl.cdiv(B, 2))
    return max(8, ((tb + 7) // 8) * 8)


def graph_nn_forward(x, params, *, tb_max=2048):
    """x: (B, 128) float32 -> logits (B, 2) float32."""
    B, D = x.shape
    assert D == 128
    w1, b1, w2, b2, w3, b3, w4, b4 = params

    # Final layer padded (64,2)->(64,8), (1,2)->(1,8) with zeros.
    w4p = jnp.zeros((64, OUT_PAD), w4.dtype).at[:, :OUT_FEATURES].set(w4)
    b4p = jnp.zeros((1, OUT_PAD), b4.dtype).at[:, :OUT_FEATURES].set(b4)

    tb = _pick_tile(B, tb_max)
    n_steps = pl.cdiv(B, tb)

    # Weights as bf16 MXU operands (tiny, constant); biases stay f32.
    w1b, w2b, w3b, w4b = (w.astype(jnp.bfloat16) for w in (w1, w2, w3, w4p))
    b1f, b2f, b3f, b4f = (b.astype(jnp.float32) for b in (b1, b2, b3, b4p))

    def batch_spec(shape):
        return pl.BlockSpec(shape, lambda i: (i, 0))

    def full_spec(shape):
        return pl.BlockSpec(shape, lambda i: (0, 0))

    flops = 2 * B * (128 * 64 + 64 * 64 + 64 * 64 + 64 * OUT_PAD)
    bytes_accessed = (B * 128 * 4                                        # x (f32)
                      + (128 * 64 + 64 * 64 + 64 * 64 + 64 * OUT_PAD) * 2  # weights (bf16)
                      + (64 * 3 + OUT_PAD) * 4                            # biases (f32)
                      + B * OUT_PAD * 4)                                   # narrow output (f32)

    out = pl.pallas_call(
        mlp_kernel,
        out_shape=jax.ShapeDtypeStruct((B, OUT_PAD), jnp.float32),
        grid_spec=pltpu.PrefetchScalarGridSpec(
            num_scalar_prefetch=0,
            grid=(n_steps,),
            in_specs=[
                batch_spec((tb, 128)),                      # x tile (f32, cast in-kernel)
                full_spec(w1b.shape), full_spec(b1f.shape),
                full_spec(w2b.shape), full_spec(b2f.shape),
                full_spec(w3b.shape), full_spec(b3f.shape),
                full_spec(w4b.shape), full_spec(b4f.shape),
            ],
            out_specs=batch_spec((tb, OUT_PAD)),            # narrow output tile
        ),
        compiler_params=pltpu.CompilerParams(
            dimension_semantics=("parallel",)),
        cost_estimate=pl.CostEstimate(
            flops=flops, transcendentals=0, bytes_accessed=bytes_accessed),
    )(x, w1b, b1f, w2b, b2f, w3b, b3f, w4b, b4f)

    return out[:, :OUT_FEATURES]


def init_params(key):
    """Deterministic init mimicking nn.Linear default (uniform +/- 1/sqrt(fan_in)).
    Weights stored as (in_features, out_features); biases as (1, out_features)."""
    dims = [(128, 64), (64, 64), (64, 64), (64, 2)]
    params = []
    for (fan_in, fan_out) in dims:
        key, kw, kb = jax.random.split(key, 3)
        bound = 1.0 / jnp.sqrt(fan_in)
        w = jax.random.uniform(kw, (fan_in, fan_out), jnp.float32, -bound, bound)
        b = jax.random.uniform(kb, (1, fan_out), jnp.float32, -bound, bound)
        params += [w, b]
    return tuple(params)


def reference_forward_f32(x, params):
    w1, b1, w2, b2, w3, b3, w4, b4 = params
    h = jnp.maximum(x @ w1 + b1, 0.0)
    h = jnp.maximum(h @ w2 + b2, 0.0)
    h = jnp.maximum(h @ w3 + b3, 0.0)
    return h @ w4 + b4


def reference_forward_bf16(x, params):
    """Reference with the same bf16-operand / f32-accumulate discipline as the kernel."""
    w1, b1, w2, b2, w3, b3, w4, b4 = params
    bf = jnp.bfloat16
    h = x.astype(bf)
    h = jnp.maximum(jnp.dot(h, w1.astype(bf), preferred_element_type=jnp.float32) + b1, 0.0).astype(bf)
    h = jnp.maximum(jnp.dot(h, w2.astype(bf), preferred_element_type=jnp.float32) + b2, 0.0).astype(bf)
    h = jnp.maximum(jnp.dot(h, w3.astype(bf), preferred_element_type=jnp.float32) + b3, 0.0).astype(bf)
    return jnp.dot(h, w4.astype(bf), preferred_element_type=jnp.float32) + b4


if __name__ == "__main__":
    key = jax.random.PRNGKey(0)
    key, kx = jax.random.split(key)
    B = 16
    x = jax.random.normal(kx, (B, 128), jnp.float32)
    params = init_params(key)

    out = graph_nn_forward(x, params)
    out = jax.block_until_ready(out)

    assert out.shape == (B, 2)
    ref_bf16 = reference_forward_bf16(x, params)
    ref_f32 = reference_forward_f32(x, params)
    # Tight check vs matching bf16-operand reference; loose check vs pure-f32 reference.
    assert jnp.allclose(out, ref_bf16, atol=2e-3, rtol=2e-3)
    assert jnp.allclose(out, ref_f32, atol=5e-2, rtol=5e-2)
    print("KERNEL_OK")
</pallas_src>

<mosaic_0001>
module attributes {stable_mosaic.version = 11 : i64} {
  func.func @mlp_kernel(%arg0: i32, %arg1: memref<8x128xf32, #tpu.memory_space<vmem>>, %arg2: memref<128x64xbf16, #tpu.memory_space<vmem>>, %arg3: memref<1x64xf32, #tpu.memory_space<vmem>>, %arg4: memref<64x64xbf16, #tpu.memory_space<vmem>>, %arg5: memref<1x64xf32, #tpu.memory_space<vmem>>, %arg6: memref<64x64xbf16, #tpu.memory_space<vmem>>, %arg7: memref<1x64xf32, #tpu.memory_space<vmem>>, %arg8: memref<64x8xbf16, #tpu.memory_space<vmem>>, %arg9: memref<1x8xf32, #tpu.memory_space<vmem>>, %arg10: memref<8x8xf32, #tpu.memory_space<vmem>>) attributes {dimension_semantics = [#tpu.dimension_semantics<parallel>], iteration_bounds = array<i64: 2>, scalar_prefetch = 0 : i64, scratch_operands = 0 : i64, tpu.core_type = #tpu.core_type<tc>, window_params = [{transform_indices = @transform_0, window_bounds = array<i64: 8, 128>}, {pipeline_mode = #tpu.pipeline_mode<synchronous>, transform_indices = @transform_1, window_bounds = array<i64: 128, 64>}, {pipeline_mode = #tpu.pipeline_mode<synchronous>, transform_indices = @transform_2, window_bounds = array<i64: 1, 64>}, {pipeline_mode = #tpu.pipeline_mode<synchronous>, transform_indices = @transform_3, window_bounds = array<i64: 64, 64>}, {pipeline_mode = #tpu.pipeline_mode<synchronous>, transform_indices = @transform_4, window_bounds = array<i64: 1, 64>}, {pipeline_mode = #tpu.pipeline_mode<synchronous>, transform_indices = @transform_5, window_bounds = array<i64: 64, 64>}, {pipeline_mode = #tpu.pipeline_mode<synchronous>, transform_indices = @transform_6, window_bounds = array<i64: 1, 64>}, {pipeline_mode = #tpu.pipeline_mode<synchronous>, transform_indices = @transform_7, window_bounds = array<i64: 64, 8>}, {pipeline_mode = #tpu.pipeline_mode<synchronous>, transform_indices = @transform_8, window_bounds = array<i64: 1, 8>}, {transform_indices = @transform_9, window_bounds = array<i64: 8, 8>}]} {
    %c0 = arith.constant 0 : index
    %c0_0 = arith.constant 0 : index
    %0 = vector.load %arg1[%c0, %c0_0] : memref<8x128xf32, #tpu.memory_space<vmem>>, vector<8x128xf32>
    %1 = arith.truncf %0 : vector<8x128xf32> to vector<8x128xbf16>
    %c0_1 = arith.constant 0 : index
    %c0_2 = arith.constant 0 : index
    %2 = vector.load %arg2[%c0_1, %c0_2] : memref<128x64xbf16, #tpu.memory_space<vmem>>, vector<128x64xbf16>
    %cst = arith.constant dense<0.000000e+00> : vector<8x64xf32>
    %3 = tpu.matmul %1, %2, %cst {dimension_numbers = #tpu.dot_dimension_numbers<[1], [0], [0], [1], [0, 0, 1, 1], [], []>} : vector<8x128xbf16>, vector<128x64xbf16>, vector<8x64xf32> -> vector<8x64xf32>
    %c0_3 = arith.constant 0 : index
    %c0_4 = arith.constant 0 : index
    %4 = vector.load %arg3[%c0_3, %c0_4] : memref<1x64xf32, #tpu.memory_space<vmem>>, vector<1x64xf32>
    %5 = vector.broadcast %4 : vector<1x64xf32> to vector<8x64xf32>
    %6 = arith.addf %3, %5 : vector<8x64xf32>
    %cst_5 = arith.constant 0.000000e+00 : f32
    %7 = vector.broadcast %cst_5 : f32 to vector<8x64xf32>
    %8 = arith.maximumf %6, %7 : vector<8x64xf32>
    %9 = arith.truncf %8 : vector<8x64xf32> to vector<8x64xbf16>
    %c0_6 = arith.constant 0 : index
    %c0_7 = arith.constant 0 : index
    %10 = vector.load %arg4[%c0_6, %c0_7] : memref<64x64xbf16, #tpu.memory_space<vmem>>, vector<64x64xbf16>
    %cst_8 = arith.constant dense<0.000000e+00> : vector<8x64xf32>
    %11 = tpu.matmul %9, %10, %cst_8 {dimension_numbers = #tpu.dot_dimension_numbers<[1], [0], [0], [1], [0, 0, 1, 1], [], []>} : vector<8x64xbf16>, vector<64x64xbf16>, vector<8x64xf32> -> vector<8x64xf32>
    %c0_9 = arith.constant 0 : index
    %c0_10 = arith.constant 0 : index
    %12 = vector.load %arg5[%c0_9, %c0_10] : memref<1x64xf32, #tpu.memory_space<vmem>>, vector<1x64xf32>
    %13 = vector.broadcast %12 : vector<1x64xf32> to vector<8x64xf32>
    %14 = arith.addf %11, %13 : vector<8x64xf32>
    %cst_11 = arith.constant 0.000000e+00 : f32
    %15 = vector.broadcast %cst_11 : f32 to vector<8x64xf32>
    %16 = arith.maximumf %14, %15 : vector<8x64xf32>
    %17 = arith.truncf %16 : vector<8x64xf32> to vector<8x64xbf16>
    %c0_12 = arith.constant 0 : index
    %c0_13 = arith.constant 0 : index
    %18 = vector.load %arg6[%c0_12, %c0_13] : memref<64x64xbf16, #tpu.memory_space<vmem>>, vector<64x64xbf16>
    %cst_14 = arith.constant dense<0.000000e+00> : vector<8x64xf32>
    %19 = tpu.matmul %17, %18, %cst_14 {dimension_numbers = #tpu.dot_dimension_numbers<[1], [0], [0], [1], [0, 0, 1, 1], [], []>} : vector<8x64xbf16>, vector<64x64xbf16>, vector<8x64xf32> -> vector<8x64xf32>
    %c0_15 = arith.constant 0 : index
    %c0_16 = arith.constant 0 : index
    %20 = vector.load %arg7[%c0_15, %c0_16] : memref<1x64xf32, #tpu.memory_space<vmem>>, vector<1x64xf32>
    %21 = vector.broadcast %20 : vector<1x64xf32> to vector<8x64xf32>
    %22 = arith.addf %19, %21 : vector<8x64xf32>
    %cst_17 = arith.constant 0.000000e+00 : f32
    %23 = vector.broadcast %cst_17 : f32 to vector<8x64xf32>
    %24 = arith.maximumf %22, %23 : vector<8x64xf32>
    %25 = arith.truncf %24 : vector<8x64xf32> to vector<8x64xbf16>
    %c0_18 = arith.constant 0 : index
    %c0_19 = arith.constant 0 : index
    %26 = vector.load %arg8[%c0_18, %c0_19] : memref<64x8xbf16, #tpu.memory_space<vmem>>, vector<64x8xbf16>
    %cst_20 = arith.constant dense<0.000000e+00> : vector<8x8xf32>
    %27 = tpu.matmul %25, %26, %cst_20 {dimension_numbers = #tpu.dot_dimension_numbers<[1], [0], [0], [1], [0, 0, 1, 1], [], []>} : vector<8x64xbf16>, vector<64x8xbf16>, vector<8x8xf32> -> vector<8x8xf32>
    %c0_21 = arith.constant 0 : index
    %c0_22 = arith.constant 0 : index
    %28 = vector.load %arg9[%c0_21, %c0_22] : memref<1x8xf32, #tpu.memory_space<vmem>>, vector<1x8xf32>
    %29 = vector.broadcast %28 : vector<1x8xf32> to vector<8x8xf32>
    %30 = arith.addf %27, %29 : vector<8x8xf32>
    %c0_23 = arith.constant 0 : index
    %c0_24 = arith.constant 0 : index
    %31 = vector.load %arg10[%c0_23, %c0_24] : memref<8x8xf32, #tpu.memory_space<vmem>>, vector<8x8xf32>
    tpu.vector_store %arg10[%c0_23, %c0_24], %30 {strides = array<i32>} : memref<8x8xf32, #tpu.memory_space<vmem>>, vector<8x8xf32>,
    return
  }
  func.func @transform_0(%arg0: i32) -> (i32, i32) {
    %c0_i32 = arith.constant 0 : i32
    %c0_i32_0 = arith.constant 0 : i32
    return %arg0, %c0_i32 : i32, i32
  }
  func.func @transform_1(%arg0: i32) -> (i32, i32) {
    %c0_i32 = arith.constant 0 : i32
    %c0_i32_0 = arith.constant 0 : i32
    %c0_i32_1 = arith.constant 0 : i32
    return %c0_i32, %c0_i32_0 : i32, i32
  }
  func.func @transform_2(%arg0: i32) -> (i32, i32) {
    %c0_i32 = arith.constant 0 : i32
    %c0_i32_0 = arith.constant 0 : i32
    %c0_i32_1 = arith.constant 0 : i32
    return %c0_i32, %c0_i32_0 : i32, i32
  }
  func.func @transform_3(%arg0: i32) -> (i32, i32) {
    %c0_i32 = arith.constant 0 : i32
    %c0_i32_0 = arith.constant 0 : i32
    %c0_i32_1 = arith.constant 0 : i32
    return %c0_i32, %c0_i32_0 : i32, i32
  }
  func.func @transform_4(%arg0: i32) -> (i32, i32) {
    %c0_i32 = arith.constant 0 : i32
    %c0_i32_0 = arith.constant 0 : i32
    %c0_i32_1 = arith.constant 0 : i32
    return %c0_i32, %c0_i32_0 : i32, i32
  }
  func.func @transform_5(%arg0: i32) -> (i32, i32) {
    %c0_i32 = arith.constant 0 : i32
    %c0_i32_0 = arith.constant 0 : i32
    %c0_i32_1 = arith.constant 0 : i32
    return %c0_i32, %c0_i32_0 : i32, i32
  }
  func.func @transform_6(%arg0: i32) -> (i32, i32) {
    %c0_i32 = arith.constant 0 : i32
    %c0_i32_0 = arith.constant 0 : i32
    %c0_i32_1 = arith.constant 0 : i32
    return %c0_i32, %c0_i32_0 : i32, i32
  }
  func.func @transform_7(%arg0: i32) -> (i32, i32) {
    %c0_i32 = arith.constant 0 : i32
    %c0_i32_0 = arith.constant 0 : i32
    %c0_i32_1 = arith.constant 0 : i32
    return %c0_i32, %c0_i32_0 : i32, i32
  }
  func.func @transform_8(%arg0: i32) -> (i32, i32) {
    %c0_i32 = arith.constant 0 : i32
    %c0_i32_0 = arith.constant 0 : i32
    %c0_i32_1 = arith.constant 0 : i32
    return %c0_i32, %c0_i32_0 : i32, i32
  }
  func.func @transform_9(%arg0: i32) -> (i32, i32) {
    %c0_i32 = arith.constant 0 : i32
    %c0_i32_0 = arith.constant 0 : i32
    return %arg0, %c0_i32 : i32, i32
  }
}

</mosaic_0001>

<llo_original>
// kernel: tpu_custom_call.1
$region0: #{tpu_custom_call.1}
  #allocation0 [shape = 'u32[]', space=smem, size = 0x4, offset = 0x4, fixed_abs, tag = 'smem constant byte address 0x4 - core index']
  #allocation1 [shape = 'u32[144,128]{1,0:T(1,128)}', space=vmem, size = 0x12000, scoped, tag = 'internal scratch']
  %s0 = inlined_call_operand.vmem [shape: f32[16,128], index: 0, kind: input, shape index: {}]
  %s1 = inlined_call_operand.vmem [shape: bf16[128,64], index: 1, kind: input, shape index: {}]
  %s2 = inlined_call_operand.vmem [shape: f32[1,64], index: 2, kind: input, shape index: {}]
  %s3 = inlined_call_operand.vmem [shape: bf16[64,64], index: 3, kind: input, shape index: {}]
  %s4 = inlined_call_operand.vmem [shape: f32[1,64], index: 4, kind: input, shape index: {}]
  %s5 = inlined_call_operand.vmem [shape: bf16[64,64], index: 5, kind: input, shape index: {}]
  %s6 = inlined_call_operand.vmem [shape: f32[1,64], index: 6, kind: input, shape index: {}]
  %s7 = inlined_call_operand.vmem [shape: bf16[64,8], index: 7, kind: input, shape index: {}]
  %s8 = inlined_call_operand.vmem [shape: f32[1,8], index: 8, kind: input, shape index: {}]
  %s9 = inlined_call_operand.vmem [shape: f32[16,8], index: 9, kind: output, shape index: {}]
  %s10 = sld [smem:[#allocation0]]
  $region69: #{tpu_custom_call.1} parent=0
    _
  %s12 = ssub.s32 1, %s10
  %s13 = scalar_select 0, %s12, %s10
  loop: start=0, step=1, limit=4
  $region2: #{tpu_custom_call.1} parent=0 // loop_pre_header
    _
  $region3: #{tpu_custom_call.1} parent=0 // loop_header
    %s15 = sphi 0, %s19
    %p16 = scmp.ge.s32.totalorder %s15, 4
    %s25 = sphi 0, %s27
    %s28 = sphi 0, %s25
    %s29 = sphi 0, %s28
    %s45 = sphi 0, %s29
    %s49 = sphi 0, %s49
    %s51 = sphi 0, %s49
    %s52 = sphi 0, %s51
    %s66 = sphi 0, %s52
    %s70 = sphi 0, %s70
    %s72 = sphi 0, %s70
    %s73 = sphi 0, %s72
    %s87 = sphi 0, %s73
    %s91 = sphi 0, %s91
    %s93 = sphi 0, %s91
    %s94 = sphi 0, %s93
    %s108 = sphi 0, %s94
    %s112 = sphi 0, %s112
    %s114 = sphi 0, %s112
    %s115 = sphi 0, %s114
    %s129 = sphi 0, %s115
    %s133 = sphi 0, %s133
    %s135 = sphi 0, %s133
    %s136 = sphi 0, %s135
    %s150 = sphi 0, %s136
    %s154 = sphi 0, %s154
    %s156 = sphi 0, %s154
    %s157 = sphi 0, %s156
    %s171 = sphi 0, %s157
    %s175 = sphi 0, %s175
    %s177 = sphi 0, %s175
    %s178 = sphi 0, %s177
    %s192 = sphi 0, %s178
    %s196 = sphi 0, %s196
    %s198 = sphi 0, %s196
    %s199 = sphi 0, %s198
    %s213 = sphi 0, %s199
    %s219 = sphi 0, %s221
    %s222 = sphi 0, %s219
    %s223 = sphi 0, %s222
    %s239 = sphi 0, %s223
  $region4: #{tpu_custom_call.1} parent=0 // loop_header_branch
    %18 = sbr.rel (%p16) target = $region8
  $region5: #{tpu_custom_call.1} parent=0 // loop_body
    %s20 = ssub.s32 %s15, 1
    %s21 = ssub.s32 %s15, 2
    %s22 = sadd.s32 %s15, 1
    %s23 = ssub.s32 %s15, %s22
    %p24 = scmp.eq.s32.totalorder %s23, 0
    %s26 = sadd.s32 %s25, 1
    %s27 = scalar_select %p24, %s25, %s26
    %p30 = pneg %p24
    %p31 = scmp.eq.s32.totalorder %s15, 1
    %p32 = por %p30, %p31
    %p33 = scmp.ne.s32.totalorder %s25, %s28
    %p34 = scmp.eq.s32.totalorder %s15, 0
    %p35 = por %p33, %p34
    %p36 = scmp.ne.s32.totalorder %s25, %s28
    %p37 = scmp.eq.s32.totalorder %s20, 1
    %p38 = por %p36, %p37
    %p39 = scmp.ne.s32.totalorder %s28, %s29
    %p40 = scmp.eq.s32.totalorder %s20, 0
    %p41 = por %p39, %p40
    %p42 = scmp.ne.s32.totalorder %s28, %s29
    %p43 = scmp.eq.s32.totalorder %s21, 1
    %p44 = por %p42, %p43
    %p46 = scmp.ne.s32.totalorder %s29, %s45
    %p47 = scmp.eq.s32.totalorder %s21, 0
    %p48 = por %p46, %p47
    %s50 = sadd.s32 %s49, 1
    %p53 = scmp.eq.s32.totalorder %s15, 1
    %p54 = scmp.ne.s32.totalorder %s49, %s51
    %p55 = scmp.eq.s32.totalorder %s15, 0
    %p56 = por %p54, %p55
    %p57 = scmp.ne.s32.totalorder %s49, %s51
    %p58 = scmp.eq.s32.totalorder %s20, 1
    %p59 = por %p57, %p58
    %p60 = scmp.ne.s32.totalorder %s51, %s52
    %p61 = scmp.eq.s32.totalorder %s20, 0
    %p62 = por %p60, %p61
    %p63 = scmp.ne.s32.totalorder %s51, %s52
    %p64 = scmp.eq.s32.totalorder %s21, 1
    %p65 = por %p63, %p64
    %p67 = scmp.ne.s32.totalorder %s52, %s66
    %p68 = scmp.eq.s32.totalorder %s21, 0
    %p69 = por %p67, %p68
    %s71 = sadd.s32 %s70, 1
    %p74 = scmp.eq.s32.totalorder %s15, 1
    %p75 = scmp.ne.s32.totalorder %s70, %s72
    %p76 = scmp.eq.s32.totalorder %s15, 0
    %p77 = por %p75, %p76
    %p78 = scmp.ne.s32.totalorder %s70, %s72
    %p79 = scmp.eq.s32.totalorder %s20, 1
    %p80 = por %p78, %p79
    %p81 = scmp.ne.s32.totalorder %s72, %s73
    %p82 = scmp.eq.s32.totalorder %s20, 0
    %p83 = por %p81, %p82
    %p84 = scmp.ne.s32.totalorder %s72, %s73
    %p85 = scmp.eq.s32.totalorder %s21, 1
    %p86 = por %p84, %p85
    %p88 = scmp.ne.s32.totalorder %s73, %s87
    %p89 = scmp.eq.s32.totalorder %s21, 0
    %p90 = por %p88, %p89
    %s92 = sadd.s32 %s91, 1
    %p95 = scmp.eq.s32.totalorder %s15, 1
    %p96 = scmp.ne.s32.totalorder %s91, %s93
    %p97 = scmp.eq.s32.totalorder %s15, 0
    %p98 = por %p96, %p97
    %p99 = scmp.ne.s32.totalorder %s91, %s93
    %p100 = scmp.eq.s32.totalorder %s20, 1
    %p101 = por %p99, %p100
    %p102 = scmp.ne.s32.totalorder %s93, %s94
    %p103 = scmp.eq.s32.totalorder %s20, 0
    %p104 = por %p102, %p103
    %p105 = scmp.ne.s32.totalorder %s93, %s94
    %p106 = scmp.eq.s32.totalorder %s21, 1
    %p107 = por %p105, %p106
    %p109 = scmp.ne.s32.totalorder %s94, %s108
    %p110 = scmp.eq.s32.totalorder %s21, 0
    %p111 = por %p109, %p110
    %s113 = sadd.s32 %s112, 1
    %p116 = scmp.eq.s32.totalorder %s15, 1
    %p117 = scmp.ne.s32.totalorder %s112, %s114
    %p118 = scmp.eq.s32.totalorder %s15, 0
    %p119 = por %p117, %p118
    %p120 = scmp.ne.s32.totalorder %s112, %s114
    %p121 = scmp.eq.s32.totalorder %s20, 1
    %p122 = por %p120, %p121
    %p123 = scmp.ne.s32.totalorder %s114, %s115
    %p124 = scmp.eq.s32.totalorder %s20, 0
    %p125 = por %p123, %p124
    %p126 = scmp.ne.s32.totalorder %s114, %s115
    %p127 = scmp.eq.s32.totalorder %s21, 1
    %p128 = por %p126, %p127
    %p130 = scmp.ne.s32.totalorder %s115, %s129
    %p131 = scmp.eq.s32.totalorder %s21, 0
    %p132 = por %p130, %p131
    %s134 = sadd.s32 %s133, 1
    %p137 = scmp.eq.s32.totalorder %s15, 1
    %p138 = scmp.ne.s32.totalorder %s133, %s135
    %p139 = scmp.eq.s32.totalorder %s15, 0
    %p140 = por %p138, %p139
    %p141 = scmp.ne.s32.totalorder %s133, %s135
    %p142 = scmp.eq.s32.totalorder %s20, 1
    %p143 = por %p141, %p142
    %p144 = scmp.ne.s32.totalorder %s135, %s136
    %p145 = scmp.eq.s32.totalorder %s20, 0
    %p146 = por %p144, %p145
    %p147 = scmp.ne.s32.totalorder %s135, %s136
    %p148 = scmp.eq.s32.totalorder %s21, 1
    %p149 = por %p147, %p148
    %p151 = scmp.ne.s32.totalorder %s136, %s150
    %p152 = scmp.eq.s32.totalorder %s21, 0
    %p153 = por %p151, %p152
    %s155 = sadd.s32 %s154, 1
    %p158 = scmp.eq.s32.totalorder %s15, 1
    %p159 = scmp.ne.s32.totalorder %s154, %s156
    %p160 = scmp.eq.s32.totalorder %s15, 0
    %p161 = por %p159, %p160
    %p162 = scmp.ne.s32.totalorder %s154, %s156
    %p163 = scmp.eq.s32.totalorder %s20, 1
    %p164 = por %p162, %p163
    %p165 = scmp.ne.s32.totalorder %s156, %s157
    %p166 = scmp.eq.s32.totalorder %s20, 0
    %p167 = por %p165, %p166
    %p168 = scmp.ne.s32.totalorder %s156, %s157
    %p169 = scmp.eq.s32.totalorder %s21, 1
    %p170 = por %p168, %p169
    %p172 = scmp.ne.s32.totalorder %s157, %s171
    %p173 = scmp.eq.s32.totalorder %s21, 0
    %p174 = por %p172, %p173
    %s176 = sadd.s32 %s175, 1
    %p179 = scmp.eq.s32.totalorder %s15, 1
    %p180 = scmp.ne.s32.totalorder %s175, %s177
    %p181 = scmp.eq.s32.totalorder %s15, 0
    %p182 = por %p180, %p181
    %p183 = scmp.ne.s32.totalorder %s175, %s177
    %p184 = scmp.eq.s32.totalorder %s20, 1
    %p185 = por %p183, %p184
    %p186 = scmp.ne.s32.totalorder %s177, %s178
    %p187 = scmp.eq.s32.totalorder %s20, 0
    %p188 = por %p186, %p187
    %p189 = scmp.ne.s32.totalorder %s177, %s178
    %p190 = scmp.eq.s32.totalorder %s21, 1
    %p191 = por %p189, %p190
    %p193 = scmp.ne.s32.totalorder %s178, %s192
    %p194 = scmp.eq.s32.totalorder %s21, 0
    %p195 = por %p193, %p194
    %s197 = sadd.s32 %s196, 1
    %p200 = scmp.eq.s32.totalorder %s15, 1
    %p201 = scmp.ne.s32.totalorder %s196, %s198
    %p202 = scmp.eq.s32.totalorder %s15, 0
    %p203 = por %p201, %p202
    %p204 = scmp.ne.s32.totalorder %s196, %s198
    %p205 = scmp.eq.s32.totalorder %s20, 1
    %p206 = por %p204, %p205
    %p207 = scmp.ne.s32.totalorder %s198, %s199
    %p208 = scmp.eq.s32.totalorder %s20, 0
    %p209 = por %p207, %p208
    %p210 = scmp.ne.s32.totalorder %s198, %s199
    %p211 = scmp.eq.s32.totalorder %s21, 1
    %p212 = por %p210, %p211
    %p214 = scmp.ne.s32.totalorder %s199, %s213
    %p215 = scmp.eq.s32.totalorder %s21, 0
    %p216 = por %p214, %p215
    %s217 = ssub.s32 %s15, %s22
    %p218 = scmp.eq.s32.totalorder %s217, 0
    %s220 = sadd.s32 %s219, 1
    %s221 = scalar_select %p218, %s219, %s220
    %p224 = pneg %p218
    %p225 = scmp.eq.s32.totalorder %s15, 1
    %p226 = por %p224, %p225
    %p227 = scmp.ne.s32.totalorder %s219, %s222
    %p228 = scmp.eq.s32.totalorder %s15, 0
    %p229 = por %p227, %p228
    %p230 = scmp.ne.s32.totalorder %s219, %s222
    %p231 = scmp.eq.s32.totalorder %s20, 1
    %p232 = por %p230, %p231
    %p233 = scmp.ne.s32.totalorder %s222, %s223
    %p234 = scmp.eq.s32.totalorder %s20, 0
    %p235 = por %p233, %p234
    %p236 = scmp.ne.s32.totalorder %s222, %s223
    %p237 = scmp.eq.s32.totalorder %s21, 1
    %p238 = por %p236, %p237
    %p240 = scmp.ne.s32.totalorder %s223, %s239
    %p241 = scmp.eq.s32.totalorder %s21, 0
    %p242 = por %p240, %p241
    %p243 = scmp.le.s32.totalorder 1, %s15
    %p244 = scmp.lt.s32.totalorder %s15, 3
    %p245 = pnand %p243, %p244
    %p246 = pneg %p245
    // Predicated region
    $region9: #{tpu_custom_call.1} parent=5 // pred_check
      _
    $region10: #{tpu_custom_call.1} parent=5 // pred_check_branch
      %248 = sbr.rel (%p245) target = $region12
    $region11: #{tpu_custom_call.1} parent=5 // pred_region
      %s249 = ssub.s32 %s15, 1
      // Predicated region
      $region13: #{tpu_custom_call.1} parent=11 // pred_check
        %p250 = pneg %p62
      $region14: #{tpu_custom_call.1} parent=11 // pred_check_branch
        %252 = sbr.rel (%p250) target = $region16
      $region15: #{tpu_custom_call.1} parent=11 // pred_region
        _
      $region16: #{tpu_custom_call.1} parent=11 // pred_fallthru
        _
      // Predicated region
      $region17: #{tpu_custom_call.1} parent=11 // pred_check
        %p253 = pneg %p83
      $region18: #{tpu_custom_call.1} parent=11 // pred_check_branch
        %255 = sbr.rel (%p253) target = $region20
      $region19: #{tpu_custom_call.1} parent=11 // pred_region
        _
      $region20: #{tpu_custom_call.1} parent=11 // pred_fallthru
        _
      // Predicated region
      $region21: #{tpu_custom_call.1} parent=11 // pred_check
        %p256 = pneg %p104
      $region22: #{tpu_custom_call.1} parent=11 // pred_check_branch
        %258 = sbr.rel (%p256) target = $region24
      $region23: #{tpu_custom_call.1} parent=11 // pred_region
        _
      $region24: #{tpu_custom_call.1} parent=11 // pred_fallthru
        _
      // Predicated region
      $region25: #{tpu_custom_call.1} parent=11 // pred_check
        %p259 = pneg %p125
      $region26: #{tpu_custom_call.1} parent=11 // pred_check_branch
        %261 = sbr.rel (%p259) target = $region28
      $region27: #{tpu_custom_call.1} parent=11 // pred_region
        _
      $region28: #{tpu_custom_call.1} parent=11 // pred_fallthru
        _
      // Predicated region
      $region29: #{tpu_custom_call.1} parent=11 // pred_check
        %p262 = pneg %p146
      $region30: #{tpu_custom_call.1} parent=11 // pred_check_branch
        %264 = sbr.rel (%p262) target = $region32
      $region31: #{tpu_custom_call.1} parent=11 // pred_region
        _
      $region32: #{tpu_custom_call.1} parent=11 // pred_fallthru
        _
      // Predicated region
      $region33: #{tpu_custom_call.1} parent=11 // pred_check
        %p265 = pneg %p167
      $region34: #{tpu_custom_call.1} parent=11 // pred_check_branch
        %267 = sbr.rel (%p265) target = $region36
      $region35: #{tpu_custom_call.1} parent=11 // pred_region
        _
      $region36: #{tpu_custom_call.1} parent=11 // pred_fallthru
        _
      // Predicated region
      $region37: #{tpu_custom_call.1} parent=11 // pred_check
        %p268 = pneg %p188
      $region38: #{tpu_custom_call.1} parent=11 // pred_check_branch
        %270 = sbr.rel (%p268) target = $region40
      $region39: #{tpu_custom_call.1} parent=11 // pred_region
        _
      $region40: #{tpu_custom_call.1} parent=11 // pred_fallthru
        _
      // Predicated region
      $region41: #{tpu_custom_call.1} parent=11 // pred_check
        %p271 = pneg %p209
      $region42: #{tpu_custom_call.1} parent=11 // pred_check_branch
        %273 = sbr.rel (%p271) target = $region44
      $region43: #{tpu_custom_call.1} parent=11 // pred_region
        _
      $region44: #{tpu_custom_call.1} parent=11 // pred_fallthru
        _
    $region12: #{tpu_custom_call.1} parent=5 // pred_fallthru
      _
    %p274 = scmp.lt.s32.totalorder %s15, 2
    // Predicated region
    $region45: #{tpu_custom_call.1} parent=5 // pred_check
      %p275 = pneg %p274
    $region46: #{tpu_custom_call.1} parent=5 // pred_check_branch
      %277 = sbr.rel (%p275) target = $region48
    $region47: #{tpu_custom_call.1} parent=5 // pred_region
      // Predicated region
      $region49: #{tpu_custom_call.1} parent=47 // pred_check
        %p278 = pneg %p35
      $region50: #{tpu_custom_call.1} parent=47 // pred_check_branch
        %280 = sbr.rel (%p278) target = $region52
      $region51: #{tpu_custom_call.1} parent=47 // pred_region
        %p281 = scmp.lt.s32.totalorder %s15, 1
        %s282 = scalar_select %p281, %s15, 1
        %s283 = smul.addr %s282, 8
        %s284 = scalar_lea.vmem %s0, %s283
      $region52: #{tpu_custom_call.1} parent=47 // pred_fallthru
        _
    $region48: #{tpu_custom_call.1} parent=5 // pred_fallthru
      _
    %p285 = scmp.le.s32.totalorder 1, %s15
    %p286 = scmp.lt.s32.totalorder %s15, 3
    %p287 = pnand %p285, %p286
    %p288 = pneg %p287
    // Predicated region
    $region53: #{tpu_custom_call.1} parent=5 // pred_check
      _
    $region54: #{tpu_custom_call.1} parent=5 // pred_check_branch
      %290 = sbr.rel (%p287) target = $region56
    $region55: #{tpu_custom_call.1} parent=5 // pred_region
      %s291 = ssub.s32 %s15, 1
      %p292 = scmp.lt.s32.totalorder %s20, 1
      %s293 = scalar_select %p292, %s20, 1
      %s294 = smul.addr %s293, 8
      %s295 = scalar_lea.vmem %s0, %s294
      %p296 = pneg %p41
      %p297 = pneg %p38
      %p298 = pneg %p62
      %p299 = pneg %p59
      %p300 = pneg %p83
      %p301 = pneg %p80
      %p302 = pneg %p104
      %p303 = pneg %p101
      %p304 = pneg %p125
      %p305 = pneg %p122
      %p306 = pneg %p146
      %p307 = pneg %p143
      %p308 = pneg %p167
      %p309 = pneg %p164
      %p310 = pneg %p188
      %p311 = pneg %p185
      %p312 = pneg %p209
      %p313 = pneg %p206
      %p314 = pneg %p235
      %p315 = pneg %p232
      %p316 = scmp.lt.s32.totalorder %s20, 1
      %s317 = scalar_select %p316, %s20, 1
      %s318 = smul.addr %s317, 8
      %s319 = scalar_lea.vmem %s9, %s318
      %p320 = scmp.lt.s32.totalorder %s20, 1
      %s321 = scalar_select %p320, %s20, 1
      %s322 = smul.addr %s321, 8
      %s323 = scalar_lea.vmem %s0, %s322
      %p324 = scmp.lt.s32.totalorder %s20, 1
      %s325 = scalar_select %p324, %s20, 1
      %s326 = smul.addr %s325, 8
      %s327 = scalar_lea.vmem %s9, %s326
      %v329 = vld [vmem:[%s323] sm:$0xff]
      %v330 = vpack.c.bf16 %v329, %v329
      %v331 = vld [vmem:[%s1] sm:$0xf]
      %v332 = vld [vmem:[%s1 + $0x4] sm:$0xf]
      %v333 = vld [vmem:[%s1 + $0x8] sm:$0xf]
      %v334 = vld [vmem:[%s1 + $0xc] sm:$0xf]
      %v335 = vld [vmem:[%s1 + $0x10] sm:$0xf]
      %v336 = vld [vmem:[%s1 + $0x14] sm:$0xf]
      %v337 = vld [vmem:[%s1 + $0x18] sm:$0xf]
      %v338 = vld [vmem:[%s1 + $0x1c] sm:$0xf]
      %v339 = vld [vmem:[%s1 + $0x20] sm:$0xf]
      %v340 = vld [vmem:[%s1 + $0x24] sm:$0xf]
      %v341 = vld [vmem:[%s1 + $0x28] sm:$0xf]
      %v342 = vld [vmem:[%s1 + $0x2c] sm:$0xf]
      %v343 = vld [vmem:[%s1 + $0x30] sm:$0xf]
      %v344 = vld [vmem:[%s1 + $0x34] sm:$0xf]
      %v345 = vld [vmem:[%s1 + $0x38] sm:$0xf]
      %v346 = vld [vmem:[%s1 + $0x3c] sm:$0xf]
      %v347 = vld [vmem:[%s2] sm:$0x1]
      %v349 = vlaneseq
      %v350 = vshrl.u32 %v349, 7
      %v351 = vsub.s32 0, %v350
      %v352 = vrot.slane %v347, %v351
      %v370 = vunpack.c.l.b16 %v331
      %v371 = vunpack.c.l.b16 %v332
      %v372 = vunpack.c.l.b16 %v333
      %v373 = vunpack.c.l.b16 %v334
      %v374 = vunpack.c.l.b16 %v335
      %v375 = vunpack.c.l.b16 %v336
      %v376 = vunpack.c.l.b16 %v337
      %v377 = vunpack.c.l.b16 %v338
      %v378 = vunpack.c.l.b16 %v339
      %v379 = vunpack.c.l.b16 %v340
      %v380 = vunpack.c.l.b16 %v341
      %v381 = vunpack.c.l.b16 %v342
      %v382 = vunpack.c.l.b16 %v343
      %v383 = vunpack.c.l.b16 %v344
      %v384 = vunpack.c.l.b16 %v345
      %v385 = vunpack.c.l.b16 %v346
      %v386 = vpack.c.b16 %v371, %v370
      %v387 = vpack.c.b16 %v373, %v372
      %v388 = vpack.c.b16 %v375, %v374
      %v389 = vpack.c.b16 %v377, %v376
      %v390 = vpack.c.b16 %v379, %v378
      %v391 = vpack.c.b16 %v381, %v380
      %v392 = vpack.c.b16 %v383, %v382
      %v393 = vpack.c.b16 %v385, %v384
      %402 = vmatprep.subr.bf16.mxu0 0
      %403 = vmatpush1.bf16.msra.mxu0 %v386
      %404 = vmatprep.subr.bf16.mxu0 0
      %405 = vmatpush1.bf16.msra.mxu0 %v387
      %406 = vmatprep.subr.bf16.mxu0 0
      %407 = vmatpush1.bf16.msra.mxu0 %v388
      %408 = vmatprep.subr.bf16.mxu0 0
      %409 = vmatpush1.bf16.msra.mxu0 %v389
      %410 = vmatprep.subr.bf16.mxu0 0
      %411 = vmatpush1.bf16.msra.mxu0 %v390
      %412 = vmatprep.subr.bf16.mxu0 0
      %413 = vmatpush1.bf16.msra.mxu0 %v391
      %414 = vmatprep.subr.bf16.mxu0 0
      %415 = vmatpush1.bf16.msra.mxu0 %v392
      %416 = vmatprep.subr.bf16.mxu0 0
      %417 = vmatpush1.bf16.msra.mxu0 %v393
      %418 = vmatprep.subr.bf16.mxu0 0
      %419 = vmatpush1.bf16.msra.mxu0 0
      %420 = vmatprep.subr.bf16.mxu0 0
      %421 = vmatpush1.bf16.msra.mxu0 0
      %422 = vmatprep.subr.bf16.mxu0 0
      %423 = vmatpush1.bf16.msra.mxu0 0
      %424 = vmatprep.subr.bf16.mxu0 0
      %425 = vmatpush1.bf16.msra.mxu0 0
      %426 = vmatprep.subr.bf16.mxu0 0
      %427 = vmatpush1.bf16.msra.mxu0 0
      %428 = vmatprep.subr.bf16.mxu0 0
      %429 = vmatpush1.bf16.msra.mxu0 0
      %430 = vmatprep.subr.bf16.mxu0 0
      %431 = vmatpush1.bf16.msra.mxu0 0
      %432 = vmatprep.subr.bf16.mxu0 0
      %433 = vmatpush1.bf16.msra.mxu0 0
      %434 = vmatprep.mubr.bf16.mxu0 0
      %435 = vmatmul.mubr.bf16.gmra.mrb[0].mxu0 %v330
      %v436 = vpop.f32.mrb[0].mxu0
      %v437 = vadd.f32 %v352, %v436
      %v438 = vpop.f32.mrb[0].mxu0
      %v439 = vpop.f32.mrb[0].mxu0
      %v440 = vpop.f32.mrb[0].mxu0
      %441 = vdwg.mxu0
      %v442 = vmax.f32 %v437, 0.0
      %v443 = vpack.c.bf16 %v442, %v442
      %v444 = vld [vmem:[%s3] sm:$0xf]
      %v445 = vld [vmem:[%s3 + $0x4] sm:$0xf]
      %v446 = vld [vmem:[%s3 + $0x8] sm:$0xf]
      %v447 = vld [vmem:[%s3 + $0xc] sm:$0xf]
      %v448 = vld [vmem:[%s3 + $0x10] sm:$0xf]
      %v449 = vld [vmem:[%s3 + $0x14] sm:$0xf]
      %v450 = vld [vmem:[%s3 + $0x18] sm:$0xf]
      %v451 = vld [vmem:[%s3 + $0x1c] sm:$0xf]
      %v452 = vld [vmem:[%s4] sm:$0x1]
      %v454 = vlaneseq
      %v455 = vshrl.u32 %v454, 7
      %v456 = vsub.s32 0, %v455
      %v457 = vrot.slane %v452, %v456
      %v467 = vunpack.c.l.b16 %v444
      %v468 = vunpack.c.l.b16 %v445
      %v469 = vunpack.c.l.b16 %v446
      %v470 = vunpack.c.l.b16 %v447
      %v471 = vunpack.c.l.b16 %v448
      %v472 = vunpack.c.l.b16 %v449
      %v473 = vunpack.c.l.b16 %v450
      %v474 = vunpack.c.l.b16 %v451
      %v475 = vpack.c.b16 %v468, %v467
      %v476 = vpack.c.b16 %v470, %v469
      %v477 = vpack.c.b16 %v472, %v471
      %v478 = vpack.c.b16 %v474, %v473
      %vm483 = vcmask 523264
      %v485 = vsel %vm483, %v443, 0
      %487 = vmatprep.subr.bf16.mxu0 0
      %488 = vmatpush1.bf16.msra.mxu0 %v475
      %489 = vmatprep.subr.bf16.mxu0 0
      %490 = vmatpush1.bf16.msra.mxu0 %v476
      %491 = vmatprep.subr.bf16.mxu0 0
      %492 = vmatpush1.bf16.msra.mxu0 %v477
      %493 = vmatprep.subr.bf16.mxu0 0
      %494 = vmatpush1.bf16.msra.mxu0 %v478
      %495 = vmatprep.subr.bf16.mxu0 0
      %496 = vmatpush1.bf16.msra.mxu0 0
      %497 = vmatprep.subr.bf16.mxu0 0
      %498 = vmatpush1.bf16.msra.mxu0 0
      %499 = vmatprep.subr.bf16.mxu0 0
      %500 = vmatpush1.bf16.msra.mxu0 0
      %501 = vmatprep.subr.bf16.mxu0 0
      %502 = vmatpush1.bf16.msra.mxu0 0
      %503 = vmatprep.subr.bf16.mxu0 0
      %504 = vmatpush1.bf16.msra.mxu0 0
      %505 = vmatprep.subr.bf16.mxu0 0
      %506 = vmatpush1.bf16.msra.mxu0 0
      %507 = vmatprep.subr.bf16.mxu0 0
      %508 = vmatpush1.bf16.msra.mxu0 0
      %509 = vmatprep.subr.bf16.mxu0 0
      %510 = vmatpush1.bf16.msra.mxu0 0
      %511 = vmatprep.subr.bf16.mxu0 0
      %512 = vmatpush1.bf16.msra.mxu0 0
      %513 = vmatprep.subr.bf16.mxu0 0
      %514 = vmatpush1.bf16.msra.mxu0 0
      %515 = vmatprep.subr.bf16.mxu0 0
      %516 = vmatpush1.bf16.msra.mxu0 0
      %517 = vmatprep.subr.bf16.mxu0 0
      %518 = vmatpush1.bf16.msra.mxu0 0
      %519 = vmatprep.mubr.bf16.mxu0 0
      %520 = vmatmul.mubr.bf16.gmra.mrb[0].mxu0 %v485
      %v521 = vpop.f32.mrb[0].mxu0
      %v522 = vadd.f32 %v457, %v521
      %v523 = vpop.f32.mrb[0].mxu0
      %v524 = vpop.f32.mrb[0].mxu0
      %v525 = vpop.f32.mrb[0].mxu0
      %526 = vdwg.mxu0
      %v527 = vmax.f32 %v522, 0.0
      %v528 = vpack.c.bf16 %v527, %v527
      %v529 = vld [vmem:[%s5] sm:$0xf]
      %v530 = vld [vmem:[%s5 + $0x4] sm:$0xf]
      %v531 = vld [vmem:[%s5 + $0x8] sm:$0xf]
      %v532 = vld [vmem:[%s5 + $0xc] sm:$0xf]
      %v533 = vld [vmem:[%s5 + $0x10] sm:$0xf]
      %v534 = vld [vmem:[%s5 + $0x14] sm:$0xf]
      %v535 = vld [vmem:[%s5 + $0x18] sm:$0xf]
      %v536 = vld [vmem:[%s5 + $0x1c] sm:$0xf]
      %v537 = vld [vmem:[%s6] sm:$0x1]
      %v539 = vlaneseq
      %v540 = vshrl.u32 %v539, 7
      %v541 = vsub.s32 0, %v540
      %v542 = vrot.slane %v537, %v541
      %v552 = vunpack.c.l.b16 %v529
      %v553 = vunpack.c.l.b16 %v530
      %v554 = vunpack.c.l.b16 %v531
      %v555 = vunpack.c.l.b16 %v532
      %v556 = vunpack.c.l.b16 %v533
      %v557 = vunpack.c.l.b16 %v534
      %v558 = vunpack.c.l.b16 %v535
      %v559 = vunpack.c.l.b16 %v536
      %v560 = vpack.c.b16 %v553, %v552
      %v561 = vpack.c.b16 %v555, %v554
      %v562 = vpack.c.b16 %v557, %v556
      %v563 = vpack.c.b16 %v559, %v558
      %v569 = vsel %vm483, %v528, 0
      %571 = vmatprep.subr.bf16.mxu0 0
      %572 = vmatpush1.bf16.msra.mxu0 %v560
      %573 = vmatprep.subr.bf16.mxu0 0
      %574 = vmatpush1.bf16.msra.mxu0 %v561
      %575 = vmatprep.subr.bf16.mxu0 0
      %576 = vmatpush1.bf16.msra.mxu0 %v562
      %577 = vmatprep.subr.bf16.mxu0 0
      %578 = vmatpush1.bf16.msra.mxu0 %v563
      %579 = vmatprep.subr.bf16.mxu0 0
      %580 = vmatpush1.bf16.msra.mxu0 0
      %581 = vmatprep.subr.bf16.mxu0 0
      %582 = vmatpush1.bf16.msra.mxu0 0
      %583 = vmatprep.subr.bf16.mxu0 0
      %584 = vmatpush1.bf16.msra.mxu0 0
      %585 = vmatprep.subr.bf16.mxu0 0
      %586 = vmatpush1.bf16.msra.mxu0 0
      %587 = vmatprep.subr.bf16.mxu0 0
      %588 = vmatpush1.bf16.msra.mxu0 0
      %589 = vmatprep.subr.bf16.mxu0 0
      %590 = vmatpush1.bf16.msra.mxu0 0
      %591 = vmatprep.subr.bf16.mxu0 0
      %592 = vmatpush1.bf16.msra.mxu0 0
      %593 = vmatprep.subr.bf16.mxu0 0
      %594 = vmatpush1.bf16.msra.mxu0 0
      %595 = vmatprep.subr.bf16.mxu0 0
      %596 = vmatpush1.bf16.msra.mxu0 0
      %597 = vmatprep.subr.bf16.mxu0 0
      %598 = vmatpush1.bf16.msra.mxu0 0
      %599 = vmatprep.subr.bf16.mxu0 0
      %600 = vmatpush1.bf16.msra.mxu0 0
      %601 = vmatprep.subr.bf16.mxu0 0
      %602 = vmatpush1.bf16.msra.mxu0 0
      %603 = vmatprep.mubr.bf16.mxu0 0
      %604 = vmatmul.mubr.bf16.gmra.mrb[0].mxu0 %v569
      %v605 = vpop.f32.mrb[0].mxu0
      %v606 = vadd.f32 %v542, %v605
      %v607 = vpop.f32.mrb[0].mxu0
      %v608 = vpop.f32.mrb[0].mxu0
      %v609 = vpop.f32.mrb[0].mxu0
      %610 = vdwg.mxu0
      %v611 = vmax.f32 %v606, 0.0
      %v612 = vpack.c.bf16 %v611, %v611
      %v613 = vld [vmem:[%s7] sm:$0xf]
      %v614 = vld [vmem:[%s7 + $0x4] sm:$0xf]
      %v615 = vld [vmem:[%s7 + $0x8] sm:$0xf]
      %v616 = vld [vmem:[%s7 + $0xc] sm:$0xf]
      %v617 = vld [vmem:[%s7 + $0x10] sm:$0xf]
      %v618 = vld [vmem:[%s7 + $0x14] sm:$0xf]
      %v619 = vld [vmem:[%s7 + $0x18] sm:$0xf]
      %v620 = vld [vmem:[%s7 + $0x1c] sm:$0xf]
      %v621 = vld [vmem:[%s8] sm:$0x1]
      %v623 = vlaneseq
      %v624 = vshrl.u32 %v623, 7
      %v625 = vsub.s32 0, %v624
      %v626 = vrot.slane %v621, %v625
      %v636 = vunpack.c.l.b16 %v613
      %v637 = vunpack.c.l.b16 %v614
      %v638 = vunpack.c.l.b16 %v615
      %v639 = vunpack.c.l.b16 %v616
      %v640 = vunpack.c.l.b16 %v617
      %v641 = vunpack.c.l.b16 %v618
      %v642 = vunpack.c.l.b16 %v619
      %v643 = vunpack.c.l.b16 %v620
      %v644 = vpack.c.b16 %v637, %v636
      %v645 = vpack.c.b16 %v639, %v638
      %v646 = vpack.c.b16 %v641, %v640
      %v647 = vpack.c.b16 %v643, %v642
      %v653 = vsel %vm483, %v612, 0
      %655 = vmatprep.subr.bf16.mxu0 0
      %656 = vmatpush1.bf16.msra.mxu0 %v644
      %657 = vmatprep.subr.bf16.mxu0 0
      %658 = vmatpush1.bf16.msra.mxu0 %v645
      %659 = vmatprep.subr.bf16.mxu0 0
      %660 = vmatpush1.bf16.msra.mxu0 %v646
      %661 = vmatprep.subr.bf16.mxu0 0
      %662 = vmatpush1.bf16.msra.mxu0 %v647
      %663 = vmatprep.subr.bf16.mxu0 0
      %664 = vmatpush1.bf16.msra.mxu0 0
      %665 = vmatprep.subr.bf16.mxu0 0
      %666 = vmatpush1.bf16.msra.mxu0 0
      %667 = vmatprep.subr.bf16.mxu0 0
      %668 = vmatpush1.bf16.msra.mxu0 0
      %669 = vmatprep.subr.bf16.mxu0 0
      %670 = vmatpush1.bf16.msra.mxu0 0
      %671 = vmatprep.subr.bf16.mxu0 0
      %672 = vmatpush1.bf16.msra.mxu0 0
      %673 = vmatprep.subr.bf16.mxu0 0
      %674 = vmatpush1.bf16.msra.mxu0 0
      %675 = vmatprep.subr.bf16.mxu0 0
      %676 = vmatpush1.bf16.msra.mxu0 0
      %677 = vmatprep.subr.bf16.mxu0 0
      %678 = vmatpush1.bf16.msra.mxu0 0
      %679 = vmatprep.subr.bf16.mxu0 0
      %680 = vmatpush1.bf16.msra.mxu0 0
      %681 = vmatprep.subr.bf16.mxu0 0
      %682 = vmatpush1.bf16.msra.mxu0 0
      %683 = vmatprep.subr.bf16.mxu0 0
      %684 = vmatpush1.bf16.msra.mxu0 0
      %685 = vmatprep.subr.bf16.mxu0 0
      %686 = vmatpush1.bf16.msra.mxu0 0
      %687 = vmatprep.mubr.bf16.mxu0 0
      %688 = vmatmul.mubr.bf16.gmra.mrb[0].mxu0 %v653
      %v689 = vpop.f32.mrb[0].mxu0
      %v690 = vadd.f32 %v626, %v689
      %v691 = vpop.f32.mrb[0].mxu0
      %v692 = vpop.f32.mrb[0].mxu0
      %v693 = vpop.f32.mrb[0].mxu0
      %694 = vdwg.mxu0
      %vm695 = vcmask 64512
      %696 = vst.msk [vmem:[%s327] sm:$0xff] %vm695, %v690
      %p697 = scmp.lt.s32.totalorder %s20, 1
      %s698 = scalar_select %p697, %s20, 1
      %s699 = smul.addr %s698, 8
      %s700 = scalar_lea.vmem %s9, %s699
      // Predicated region
      $region57: #{tpu_custom_call.1} parent=55 // pred_check
        %p701 = pneg %p232
      $region58: #{tpu_custom_call.1} parent=55 // pred_check_branch
        %703 = sbr.rel (%p701) target = $region60
      $region59: #{tpu_custom_call.1} parent=55 // pred_region
        _
      $region60: #{tpu_custom_call.1} parent=55 // pred_fallthru
        _
    $region56: #{tpu_custom_call.1} parent=5 // pred_fallthru
      _
    %p704 = scmp.le.s32.totalorder 2, %s15
    // Predicated region
    $region61: #{tpu_custom_call.1} parent=5 // pred_check
      %p705 = pneg %p704
    $region62: #{tpu_custom_call.1} parent=5 // pred_check_branch
      %707 = sbr.rel (%p705) target = $region64
    $region63: #{tpu_custom_call.1} parent=5 // pred_region
      %s708 = ssub.s32 %s15, 2
      // Predicated region
      $region65: #{tpu_custom_call.1} parent=63 // pred_check
        %p709 = pneg %p238
      $region66: #{tpu_custom_call.1} parent=63 // pred_check_branch
        %711 = sbr.rel (%p709) target = $region68
      $region67: #{tpu_custom_call.1} parent=63 // pred_region
        %p712 = scmp.lt.s32.totalorder %s21, 1
        %s713 = scalar_select %p712, %s21, 1
        %s714 = smul.addr %s713, 8
        %s715 = scalar_lea.vmem %s9, %s714
      $region68: #{tpu_custom_call.1} parent=63 // pred_fallthru
        _
    $region64: #{tpu_custom_call.1} parent=5 // pred_fallthru
      _
  $region6: #{tpu_custom_call.1} parent=0 // loop_footer
    %s19 = sadd.s32 1, %s15
  $region7: #{tpu_custom_call.1} parent=0 // loop_footer_branch
    %14 = sbr.rel target = $region3
  $region8: #{tpu_custom_call.1} parent=0 // loop_exit
    _

</llo_original>
